<compile_context>
chip_gen: v5e
topology: v5e:2x2
jax: 0.10.0
libtpu: 0.0.40
codegen_flags: <defaults>
</compile_context>

<pallas_src>
import functools

import jax
import jax.numpy as jnp
import numpy as np
from jax.experimental import pallas as pl
from jax.experimental.pallas import tpu as pltpu

N_NEIGH = 6       # number of neighbor vehicles (repeat(1, 6, 1))
NPAD = 8          # neighbor axis padded to a full sublane tile
D_FEAT = 128      # per-vehicle feature dim
D_HID_ATT = 128   # attention-MLP hidden dim (Linear(256, 128))
D_DEC = 64        # layer1 output dim        (Linear(256, 64))
D_LSTM = 128      # LSTM hidden dim          (LSTMCell(64, 128))
NEG_SLOPE = 0.01  # nn.LeakyReLU default negative_slope


def _leaky(x):
    return jnp.where(x >= 0, x, NEG_SLOPE * x)


def _sigmoid(x):
    # tanh identity: one EUP push instead of exp + reciprocal (matters on v5e)
    return 0.5 * (jnp.tanh(0.5 * x) + 1.0)


def _attention_decoder_kernel(
    x1_ref, x2_ref, x3_ref, x4_ref,
    wa1x_ref, wx2f_ref, ba1_ref, wa2_ref, ba2_ref,
    wl1f_ref, bl1_ref, wih_ref, blstm_ref,
    score_ref, h_ref, c_ref,
):
    # x1 is bf16 in HBM; upcast immediately so the reshape below stays on the
    # f32 (8,128)-tile-aligned path (no relayout copy).
    x1 = x1_ref[...].astype(jnp.float32)     # (TB, 8, 128), neighbors 6..7 zero pad
    x2 = x2_ref[...]                         # (TB, 128) f32  (prev hidden h)
    x3 = x3_ref[...]                         # (TB, 128) f32  (prev cell   c)
    tb = x1.shape[0]

    # ---- fused x2 projection: [wa1_self | W_hh] -> (TB, 128 + 512) -------------
    x2_proj = jnp.dot(x2.astype(jnp.bfloat16), wx2f_ref[...],
                      preferred_element_type=jnp.float32)
    self_part = x2_proj[:, :D_HID_ATT] + ba1_ref[...]        # (TB, 128)
    hh_gates = x2_proj[:, D_HID_ATT:]                        # (TB, 512)

    # ---- attention MLP hidden: Linear(256,128) over cat([x1, x2.repeat], -1) ----
    x1f = x1.reshape(tb * NPAD, D_FEAT).astype(jnp.bfloat16)
    hid = jnp.dot(x1f, wa1x_ref[...], preferred_element_type=jnp.float32)
    hid = hid.reshape(tb, NPAD, D_HID_ATT)
    hid = _leaky(hid + self_part[:, None, :])                # (TB, 8, 128)

    # ---- Linear(128,1) + LeakyReLU + Softmax over the 6 real neighbors ----------
    logits = jnp.sum(hid * wa2_ref[...].reshape(1, 1, D_HID_ATT), axis=-1)  # (TB, 8)
    logits = _leaky(logits + ba2_ref[0, 0])
    nidx = jax.lax.broadcasted_iota(jnp.int32, (tb, NPAD), 1)
    logits = jnp.where(nidx < N_NEIGH, logits, -1e30)        # mask pad neighbors
    m = jnp.max(logits, axis=1, keepdims=True)
    e = jnp.exp(logits - m)
    att = e * pl.reciprocal(jnp.sum(e, axis=1, keepdims=True), approx=True)
    score_ref[...] = att                                     # (TB, 8), pad cols ~ 0

    # ---- Aggregation1 = attention_score @ x1 (pad rows contribute 0) ------------
    agg = jnp.sum(att[:, :, None] * x1, axis=1)              # (TB, 128) f32

    # ---- layer1: Linear(256,64) over cat([x4, agg], 1) as one K=256 matmul ------
    dec_in = jnp.concatenate([x4_ref[...], agg.astype(jnp.bfloat16)], axis=1)  # (TB,256)
    dec = jnp.dot(dec_in, wl1f_ref[...],
                  preferred_element_type=jnp.float32) + bl1_ref[...]           # (TB,64)
    xt = _leaky(dec)

    # ---- LSTMCell(64,128): gate order [i, f, g, o] (PyTorch convention) ---------
    gates = (jnp.dot(xt.astype(jnp.bfloat16), wih_ref[...],
                     preferred_element_type=jnp.float32)
             + hh_gates + blstm_ref[...])                    # (TB, 512)
    i_g = _sigmoid(gates[:, 0 * D_LSTM:1 * D_LSTM])
    f_g = _sigmoid(gates[:, 1 * D_LSTM:2 * D_LSTM])
    g_g = jnp.tanh(gates[:, 2 * D_LSTM:3 * D_LSTM])
    o_g = _sigmoid(gates[:, 3 * D_LSTM:4 * D_LSTM])
    c_new = f_g * x3 + i_g * g_g
    h_new = o_g * jnp.tanh(c_new)
    h_ref[...] = h_new
    c_ref[...] = c_new


def init_params(key):
    """Deterministic PyTorch-style uniform init (weights in torch (out,in) layout)."""
    ks = jax.random.split(key, 10)

    def uni(k, shape, bound):
        return jax.random.uniform(k, shape, jnp.float32, -bound, bound)

    b_a1 = 1.0 / np.sqrt(256.0)
    b_a2 = 1.0 / np.sqrt(128.0)
    b_l1 = 1.0 / np.sqrt(256.0)
    b_ls = 1.0 / np.sqrt(float(D_LSTM))
    return {
        "wa1": uni(ks[0], (D_HID_ATT, 2 * D_FEAT), b_a1), "ba1": uni(ks[1], (D_HID_ATT,), b_a1),
        "wa2": uni(ks[2], (1, D_HID_ATT), b_a2),          "ba2": uni(ks[3], (1,), b_a2),
        "wl1": uni(ks[4], (D_DEC, 2 * D_FEAT), b_l1),     "bl1": uni(ks[5], (D_DEC,), b_l1),
        "wih": uni(ks[6], (4 * D_LSTM, D_DEC), b_ls),     "bih": uni(ks[7], (4 * D_LSTM,), b_ls),
        "whh": uni(ks[8], (4 * D_LSTM, D_LSTM), b_ls),    "bhh": uni(ks[9], (4 * D_LSTM,), b_ls),
    }


def prepare_params(params):
    """One-time weight preprocessing (call once, reuse across decode steps)."""
    wa1 = params["wa1"]                                   # (128, 256) torch (out,in)
    return {
        "wa1x": wa1[:, :D_FEAT].T.astype(jnp.bfloat16),                         # (128,128)
        # fused [wa1_self | W_hh] -> single (128, 640) RHS for the x2 matmul
        "wx2f": jnp.concatenate([wa1[:, D_FEAT:].T, params["whh"].T],
                                axis=1).astype(jnp.bfloat16),                   # (128,640)
        "ba1": params["ba1"].reshape(1, D_HID_ATT).astype(jnp.float32),
        "wa2": params["wa2"].reshape(1, D_HID_ATT).astype(jnp.float32),
        "ba2": params["ba2"].reshape(1, 1).astype(jnp.float32),                 # SMEM scalar
        # layer1 fused to a single K=256 RHS: rows 0..127 = x4 part, 128..255 = agg part
        "wl1f": params["wl1"].T.astype(jnp.bfloat16),                           # (256,64)
        "bl1": params["bl1"].reshape(1, D_DEC).astype(jnp.float32),
        "wih": params["wih"].T.astype(jnp.bfloat16),                            # (64,512)
        "blstm": (params["bih"] + params["bhh"]).reshape(1, 4 * D_LSTM).astype(jnp.float32),
    }


def _pick_batch_tile(b):
    # Block second-to-last dims must be a multiple of 8 or equal the full dim.
    if b <= 8:
        return b
    tb = min(512, (b // 8) * 8)
    # Prefer >= 2 grid steps once there is enough work so v7x's two TensorCores
    # both get batch tiles under dimension_semantics=("parallel",).
    if b >= 64 and -(-b // tb) < 2:
        tb = max(8, ((-(-b // 2) + 7) // 8) * 8)
    return tb


@functools.partial(jax.jit, donate_argnums=(2, 3))
def attention_decoder_forward(prepped, x1, x2, x3, x4):
    B = x1.shape[0]
    TB = _pick_batch_tile(B)
    nb = pl.cdiv(B, TB)

    # Pad neighbor axis 6 -> 8 fused with the bf16 downcast (single pass over x1).
    x1p = jnp.pad(x1.astype(jnp.bfloat16), ((0, 0), (0, NPAD - N_NEIGH), (0, 0)))
    x4b = x4.astype(jnp.bfloat16)

    def w_res(shape):  # weight/bias resident across grid steps (constant block index)
        return pl.BlockSpec(shape, lambda i: (0, 0))

    grid_spec = pltpu.PrefetchScalarGridSpec(
        num_scalar_prefetch=0,
        grid=(nb,),
        in_specs=[
            pl.BlockSpec((TB, NPAD, D_FEAT), lambda i: (i, 0, 0)),   # x1 (padded, bf16)
            pl.BlockSpec((TB, D_FEAT), lambda i: (i, 0)),            # x2 (f32 state)
            pl.BlockSpec((TB, D_FEAT), lambda i: (i, 0)),            # x3 (f32 state)
            pl.BlockSpec((TB, D_FEAT), lambda i: (i, 0)),            # x4 (bf16)
            w_res((D_FEAT, D_HID_ATT)),                              # wa1x
            w_res((D_FEAT, D_HID_ATT + 4 * D_LSTM)),                 # wx2f (fused)
            w_res((1, D_HID_ATT)),                                   # ba1
            w_res((1, D_HID_ATT)),                                   # wa2
            pl.BlockSpec(memory_space=pltpu.MemorySpace.SMEM),       # ba2 scalar
            w_res((2 * D_FEAT, D_DEC)),                              # wl1f (fused K=256)
            w_res((1, D_DEC)),                                       # bl1
            w_res((D_DEC, 4 * D_LSTM)),                              # wih
            w_res((1, 4 * D_LSTM)),                                  # blstm
        ],
        out_specs=(
            pl.BlockSpec((TB, NPAD), lambda i: (i, 0)),              # attention scores
            pl.BlockSpec((TB, D_LSTM), lambda i: (i, 0)),            # H0
            pl.BlockSpec((TB, D_LSTM), lambda i: (i, 0)),            # C0
        ),
    )

    cost = pl.CostEstimate(
        flops=528_000 * B,          # ~2*(128*640 + 8*128*128 + 256*64 + 64*512 + ...) per row
        transcendentals=700 * B,    # softmax exp + LSTM tanh/sigmoid
        bytes_accessed=4_400 * B + 300_000,
    )

    scores, h0, c0 = pl.pallas_call(
        _attention_decoder_kernel,
        out_shape=(
            jax.ShapeDtypeStruct((B, NPAD), jnp.float32),
            jax.ShapeDtypeStruct((B, D_LSTM), jnp.float32),
            jax.ShapeDtypeStruct((B, D_LSTM), jnp.float32),
        ),
        grid_spec=grid_spec,
        compiler_params=pltpu.CompilerParams(
            dimension_semantics=("parallel",),
            vmem_limit_bytes=48 * 1024 * 1024,   # TB=512 needs ~15 MiB; leave headroom
        ),
        cost_estimate=cost,
        # recurrent state updated in place: x2 -> H0, x3 -> C0 (x2/x3 donated at jit)
        input_output_aliases={1: 1, 2: 2},
    )(x1p, x2, x3, x4b,
      prepped["wa1x"], prepped["wx2f"], prepped["ba1"], prepped["wa2"],
      prepped["ba2"], prepped["wl1f"], prepped["bl1"],
      prepped["wih"], prepped["blstm"])

    # torch returns attention_score transposed to (B, 1, 6)
    attention_score = scores[:, :N_NEIGH].reshape(B, 1, N_NEIGH)
    return attention_score, h0, c0


def reference_forward(params, x1, x2, x3, x4):
    """Pure-JAX f32 mirror of the PyTorch forward, for verification."""
    def leaky(v):
        return jnp.where(v >= 0, v, NEG_SLOPE * v)

    self_veh = jnp.repeat(x2[:, None, :], N_NEIGH, axis=1)
    x = jnp.concatenate([x1, self_veh], axis=2)                         # (B,6,256)
    h = leaky(x @ params["wa1"].T + params["ba1"])
    s = leaky(h @ params["wa2"].T + params["ba2"])                      # (B,6,1)
    att = jax.nn.softmax(s, axis=1)
    att_t = jnp.swapaxes(att, 1, 2)                                     # (B,1,6)
    agg = jnp.squeeze(att_t @ x1, axis=1)                               # (B,128)
    dec = jnp.concatenate([x4, agg], axis=1) @ params["wl1"].T + params["bl1"]
    xt = leaky(dec)
    gates = xt @ params["wih"].T + params["bih"] + x2 @ params["whh"].T + params["bhh"]
    i, f, g, o = jnp.split(gates, 4, axis=1)
    c_new = jax.nn.sigmoid(f) * x3 + jax.nn.sigmoid(i) * jnp.tanh(g)
    h_new = jax.nn.sigmoid(o) * jnp.tanh(c_new)
    return att_t, h_new, c_new


if __name__ == "__main__":
    B = 2
    key = jax.random.PRNGKey(0)
    k1, k2, k3, k4 = jax.random.split(key, 4)
    x1 = jax.random.normal(k1, (B, N_NEIGH, D_FEAT), jnp.float32)
    x2 = jax.random.normal(k2, (B, D_FEAT), jnp.float32)
    x3 = jax.random.normal(k3, (B, D_FEAT), jnp.float32)
    x4 = jax.random.normal(k4, (B, D_FEAT), jnp.float32)
    params = init_params(jax.random.PRNGKey(42))
    prepped = prepare_params(params)          # one-time, outside the decode loop

    # Compute the reference BEFORE the kernel call: x2/x3 are donated to the jit
    # (so the in-place H0/C0 aliasing is real) and become unusable afterwards.
    att_r, h_r, c_r = reference_forward(params, x1, x2, x3, x4)

    att, h0, c0 = jax.block_until_ready(
        attention_decoder_forward(prepped, x1, x2, x3, x4))

    assert att.shape == (B, 1, N_NEIGH)
    assert h0.shape == (B, D_LSTM) and c0.shape == (B, D_LSTM)
    # bf16 matmul operands / bf16 x1 storage with f32 accumulation -> compare at 2e-2
    np.testing.assert_allclose(np.asarray(att), np.asarray(att_r), rtol=2e-2, atol=2e-2)
    np.testing.assert_allclose(np.asarray(h0), np.asarray(h_r), rtol=2e-2, atol=2e-2)
    np.testing.assert_allclose(np.asarray(c0), np.asarray(c_r), rtol=2e-2, atol=2e-2)
    print("KERNEL_OK")
</pallas_src>

<mosaic_0001>
module attributes {stable_mosaic.version = 11 : i64} {
  func.func @_attention_decoder_kernel(%arg0: i32, %arg1: memref<2x8x128xbf16, #tpu.memory_space<vmem>>, %arg2: memref<2x128xf32, #tpu.memory_space<vmem>>, %arg3: memref<2x128xf32, #tpu.memory_space<vmem>>, %arg4: memref<2x128xbf16, #tpu.memory_space<vmem>>, %arg5: memref<128x128xbf16, #tpu.memory_space<vmem>>, %arg6: memref<128x640xbf16, #tpu.memory_space<vmem>>, %arg7: memref<1x128xf32, #tpu.memory_space<vmem>>, %arg8: memref<1x128xf32, #tpu.memory_space<vmem>>, %arg9: memref<1x1xf32, #tpu.memory_space<smem>>, %arg10: memref<256x64xbf16, #tpu.memory_space<vmem>>, %arg11: memref<1x64xf32, #tpu.memory_space<vmem>>, %arg12: memref<64x512xbf16, #tpu.memory_space<vmem>>, %arg13: memref<1x512xf32, #tpu.memory_space<vmem>>, %arg14: memref<2x8xf32, #tpu.memory_space<vmem>>, %arg15: memref<2x128xf32, #tpu.memory_space<vmem>>, %arg16: memref<2x128xf32, #tpu.memory_space<vmem>>) attributes {dimension_semantics = [#tpu.dimension_semantics<parallel>], iteration_bounds = array<i64: 1>, scalar_prefetch = 0 : i64, scratch_operands = 0 : i64, tpu.core_type = #tpu.core_type<tc>, window_params = [{transform_indices = @transform_0, window_bounds = array<i64: 2, 8, 128>}, {transform_indices = @transform_1, window_bounds = array<i64: 2, 128>}, {transform_indices = @transform_2, window_bounds = array<i64: 2, 128>}, {transform_indices = @transform_3, window_bounds = array<i64: 2, 128>}, {pipeline_mode = #tpu.pipeline_mode<synchronous>, transform_indices = @transform_4, window_bounds = array<i64: 128, 128>}, {pipeline_mode = #tpu.pipeline_mode<synchronous>, transform_indices = @transform_5, window_bounds = array<i64: 128, 640>}, {pipeline_mode = #tpu.pipeline_mode<synchronous>, transform_indices = @transform_6, window_bounds = array<i64: 1, 128>}, {pipeline_mode = #tpu.pipeline_mode<synchronous>, transform_indices = @transform_7, window_bounds = array<i64: 1, 128>}, {transform_indices = @transform_8, window_bounds = array<i64: 1, 1>}, {pipeline_mode = #tpu.pipeline_mode<synchronous>, transform_indices = @transform_9, window_bounds = array<i64: 256, 64>}, {pipeline_mode = #tpu.pipeline_mode<synchronous>, transform_indices = @transform_10, window_bounds = array<i64: 1, 64>}, {pipeline_mode = #tpu.pipeline_mode<synchronous>, transform_indices = @transform_11, window_bounds = array<i64: 64, 512>}, {pipeline_mode = #tpu.pipeline_mode<synchronous>, transform_indices = @transform_12, window_bounds = array<i64: 1, 512>}, {transform_indices = @transform_13, window_bounds = array<i64: 2, 8>}, {transform_indices = @transform_14, window_bounds = array<i64: 2, 128>}, {transform_indices = @transform_15, window_bounds = array<i64: 2, 128>}]} {
    %c0 = arith.constant 0 : index
    %c0_0 = arith.constant 0 : index
    %c0_1 = arith.constant 0 : index
    %0 = vector.load %arg1[%c0, %c0_0, %c0_1] : memref<2x8x128xbf16, #tpu.memory_space<vmem>>, vector<2x8x128xbf16>
    %1 = arith.extf %0 : vector<2x8x128xbf16> to vector<2x8x128xf32>
    %c0_2 = arith.constant 0 : index
    %c0_3 = arith.constant 0 : index
    %2 = vector.load %arg2[%c0_2, %c0_3] : memref<2x128xf32, #tpu.memory_space<vmem>>, vector<2x128xf32>
    %c0_4 = arith.constant 0 : index
    %c0_5 = arith.constant 0 : index
    %3 = vector.load %arg3[%c0_4, %c0_5] : memref<2x128xf32, #tpu.memory_space<vmem>>, vector<2x128xf32>
    %4 = arith.truncf %2 : vector<2x128xf32> to vector<2x128xbf16>
    %c0_6 = arith.constant 0 : index
    %c0_7 = arith.constant 0 : index
    %5 = vector.load %arg6[%c0_6, %c0_7] : memref<128x640xbf16, #tpu.memory_space<vmem>>, vector<128x640xbf16>
    %cst = arith.constant dense<0.000000e+00> : vector<2x640xf32>
    %6 = tpu.matmul %4, %5, %cst {dimension_numbers = #tpu.dot_dimension_numbers<[1], [0], [0], [1], [0, 0, 1, 1], [], []>} : vector<2x128xbf16>, vector<128x640xbf16>, vector<2x640xf32> -> vector<2x640xf32>
    %7 = vector.extract_strided_slice %6 {offsets = [0, 0], sizes = [2, 128], strides = [1, 1]} : vector<2x640xf32> to vector<2x128xf32>
    %c0_8 = arith.constant 0 : index
    %c0_9 = arith.constant 0 : index
    %8 = vector.load %arg7[%c0_8, %c0_9] : memref<1x128xf32, #tpu.memory_space<vmem>>, vector<1x128xf32>
    %9 = vector.broadcast %8 : vector<1x128xf32> to vector<2x128xf32>
    %10 = arith.addf %7, %9 : vector<2x128xf32>
    %11 = vector.extract_strided_slice %6 {offsets = [0, 128], sizes = [2, 512], strides = [1, 1]} : vector<2x640xf32> to vector<2x512xf32>
    %12 = vector.shape_cast %1 : vector<2x8x128xf32> to vector<16x128xf32>
    %13 = arith.truncf %12 : vector<16x128xf32> to vector<16x128xbf16>
    %c0_10 = arith.constant 0 : index
    %c0_11 = arith.constant 0 : index
    %14 = vector.load %arg5[%c0_10, %c0_11] : memref<128x128xbf16, #tpu.memory_space<vmem>>, vector<128x128xbf16>
    %cst_12 = arith.constant dense<0.000000e+00> : vector<16x128xf32>
    %15 = tpu.matmul %13, %14, %cst_12 {dimension_numbers = #tpu.dot_dimension_numbers<[1], [0], [0], [1], [0, 0, 1, 1], [], []>} : vector<16x128xbf16>, vector<128x128xbf16>, vector<16x128xf32> -> vector<16x128xf32>
    %16 = vector.shape_cast %15 : vector<16x128xf32> to vector<2x8x128xf32>
    %17 = vector.shape_cast %10 : vector<2x128xf32> to vector<2x1x128xf32>
    %18 = vector.broadcast %17 : vector<2x1x128xf32> to vector<2x8x128xf32>
    %19 = arith.addf %16, %18 : vector<2x8x128xf32>
    %cst_13 = arith.constant 0.000000e+00 : f32
    %20 = vector.broadcast %cst_13 : f32 to vector<2x8x128xf32>
    %21 = arith.cmpf oge, %19, %20 : vector<2x8x128xf32>
    %cst_14 = arith.constant 0.00999999977 : f32
    %22 = vector.broadcast %cst_14 : f32 to vector<2x8x128xf32>
    %23 = arith.mulf %22, %19 : vector<2x8x128xf32>
    %24 = arith.select %21, %19, %23 : vector<2x8x128xi1>, vector<2x8x128xf32>
    %c0_15 = arith.constant 0 : index
    %c0_16 = arith.constant 0 : index
    %25 = vector.load %arg8[%c0_15, %c0_16] : memref<1x128xf32, #tpu.memory_space<vmem>>, vector<1x128xf32>
    %26 = vector.shape_cast %25 : vector<1x128xf32> to vector<1x1x128xf32>
    %27 = vector.broadcast %26 : vector<1x1x128xf32> to vector<2x8x128xf32>
    %28 = arith.mulf %24, %27 : vector<2x8x128xf32>
    %cst_17 = arith.constant dense<0.000000e+00> : vector<2x8xf32>
    %29 = vector.multi_reduction <add>, %28, %cst_17 [2] : vector<2x8x128xf32> to vector<2x8xf32>
    %c0_18 = arith.constant 0 : index
    %c0_19 = arith.constant 0 : index
    %30 = memref.load %arg9[%c0_18, %c0_19] : memref<1x1xf32, #tpu.memory_space<smem>>
    %31 = vector.broadcast %30 : f32 to vector<2x8xf32>
    %32 = arith.addf %29, %31 : vector<2x8xf32>
    %cst_20 = arith.constant 0.000000e+00 : f32
    %33 = vector.broadcast %cst_20 : f32 to vector<2x8xf32>
    %34 = arith.cmpf oge, %32, %33 : vector<2x8xf32>
    %cst_21 = arith.constant 0.00999999977 : f32
    %35 = vector.broadcast %cst_21 : f32 to vector<2x8xf32>
    %36 = arith.mulf %35, %32 : vector<2x8xf32>
    %37 = arith.select %34, %32, %36 : vector<2x8xi1>, vector<2x8xf32>
    %38 = tpu.iota {dimensions = array<i32: 1>} : vector<2x8xi32>
    %c6_i32 = arith.constant 6 : i32
    %39 = vector.broadcast %c6_i32 : i32 to vector<2x8xi32>
    %40 = arith.cmpi slt, %38, %39 : vector<2x8xi32>
    %cst_22 = arith.constant -1.000000e+30 : f32
    %41 = vector.broadcast %cst_22 : f32 to vector<2x8xf32>
    %42 = arith.select %40, %37, %41 : vector<2x8xi1>, vector<2x8xf32>
    %cst_23 = arith.constant dense<0xFF800000> : vector<2xf32>
    %43 = vector.multi_reduction <maximumf>, %42, %cst_23 [1] : vector<2x8xf32> to vector<2xf32>
    %44 = vector.shape_cast %43 : vector<2xf32> to vector<2x1xf32>
    %45 = vector.broadcast %44 : vector<2x1xf32> to vector<2x8xf32>
    %46 = arith.subf %42, %45 : vector<2x8xf32>
    %47 = math.exp %46 : vector<2x8xf32>
    %cst_24 = arith.constant dense<0.000000e+00> : vector<2xf32>
    %48 = vector.multi_reduction <add>, %47, %cst_24 [1] : vector<2x8xf32> to vector<2xf32>
    %49 = vector.shape_cast %48 : vector<2xf32> to vector<2x1xf32>
    %50 = tpu.reciprocal %49 {approx = true} : vector<2x1xf32> -> vector<2x1xf32>
    %51 = vector.broadcast %50 : vector<2x1xf32> to vector<2x8xf32>
    %52 = arith.mulf %47, %51 : vector<2x8xf32>
    %c0_25 = arith.constant 0 : index
    %c0_26 = arith.constant 0 : index
    %53 = vector.load %arg14[%c0_25, %c0_26] : memref<2x8xf32, #tpu.memory_space<vmem>>, vector<2x8xf32>
    tpu.vector_store %arg14[%c0_25, %c0_26], %52 {strides = array<i32>} : memref<2x8xf32, #tpu.memory_space<vmem>>, vector<2x8xf32>,
    %54 = vector.shape_cast %52 : vector<2x8xf32> to vector<2x8x1xf32>
    %55 = vector.broadcast %54 : vector<2x8x1xf32> to vector<2x8x128xf32>
    %56 = arith.mulf %55, %1 : vector<2x8x128xf32>
    %cst_27 = arith.constant dense<0.000000e+00> : vector<2x128xf32>
    %57 = vector.multi_reduction <add>, %56, %cst_27 [1] : vector<2x8x128xf32> to vector<2x128xf32>
    %c0_28 = arith.constant 0 : index
    %c0_29 = arith.constant 0 : index
    %58 = vector.load %arg4[%c0_28, %c0_29] : memref<2x128xbf16, #tpu.memory_space<vmem>>, vector<2x128xbf16>
    %59 = arith.truncf %57 : vector<2x128xf32> to vector<2x128xbf16>
    %60 = tpu.concatenate %58, %59 in 1 : vector<2x128xbf16>, vector<2x128xbf16> -> vector<2x256xbf16>
    %c0_30 = arith.constant 0 : index
    %c0_31 = arith.constant 0 : index
    %61 = vector.load %arg10[%c0_30, %c0_31] : memref<256x64xbf16, #tpu.memory_space<vmem>>, vector<256x64xbf16>
    %cst_32 = arith.constant dense<0.000000e+00> : vector<2x64xf32>
    %62 = tpu.matmul %60, %61, %cst_32 {dimension_numbers = #tpu.dot_dimension_numbers<[1], [0], [0], [1], [0, 0, 1, 1], [], []>} : vector<2x256xbf16>, vector<256x64xbf16>, vector<2x64xf32> -> vector<2x64xf32>
    %c0_33 = arith.constant 0 : index
    %c0_34 = arith.constant 0 : index
    %63 = vector.load %arg11[%c0_33, %c0_34] : memref<1x64xf32, #tpu.memory_space<vmem>>, vector<1x64xf32>
    %64 = vector.broadcast %63 : vector<1x64xf32> to vector<2x64xf32>
    %65 = arith.addf %62, %64 : vector<2x64xf32>
    %cst_35 = arith.constant 0.000000e+00 : f32
    %66 = vector.broadcast %cst_35 : f32 to vector<2x64xf32>
    %67 = arith.cmpf oge, %65, %66 : vector<2x64xf32>
    %cst_36 = arith.constant 0.00999999977 : f32
    %68 = vector.broadcast %cst_36 : f32 to vector<2x64xf32>
    %69 = arith.mulf %68, %65 : vector<2x64xf32>
    %70 = arith.select %67, %65, %69 : vector<2x64xi1>, vector<2x64xf32>
    %71 = arith.truncf %70 : vector<2x64xf32> to vector<2x64xbf16>
    %c0_37 = arith.constant 0 : index
    %c0_38 = arith.constant 0 : index
    %72 = vector.load %arg12[%c0_37, %c0_38] : memref<64x512xbf16, #tpu.memory_space<vmem>>, vector<64x512xbf16>
    %cst_39 = arith.constant dense<0.000000e+00> : vector<2x512xf32>
    %73 = tpu.matmul %71, %72, %cst_39 {dimension_numbers = #tpu.dot_dimension_numbers<[1], [0], [0], [1], [0, 0, 1, 1], [], []>} : vector<2x64xbf16>, vector<64x512xbf16>, vector<2x512xf32> -> vector<2x512xf32>
    %74 = arith.addf %73, %11 : vector<2x512xf32>
    %c0_40 = arith.constant 0 : index
    %c0_41 = arith.constant 0 : index
    %75 = vector.load %arg13[%c0_40, %c0_41] : memref<1x512xf32, #tpu.memory_space<vmem>>, vector<1x512xf32>
    %76 = vector.broadcast %75 : vector<1x512xf32> to vector<2x512xf32>
    %77 = arith.addf %74, %76 : vector<2x512xf32>
    %78 = vector.extract_strided_slice %77 {offsets = [0, 0], sizes = [2, 128], strides = [1, 1]} : vector<2x512xf32> to vector<2x128xf32>
    %cst_42 = arith.constant 5.000000e-01 : f32
    %79 = vector.broadcast %cst_42 : f32 to vector<2x128xf32>
    %80 = arith.mulf %79, %78 : vector<2x128xf32>
    %81 = math.tanh %80 : vector<2x128xf32>
    %cst_43 = arith.constant 1.000000e+00 : f32
    %82 = vector.broadcast %cst_43 : f32 to vector<2x128xf32>
    %83 = arith.addf %81, %82 : vector<2x128xf32>
    %cst_44 = arith.constant 5.000000e-01 : f32
    %84 = vector.broadcast %cst_44 : f32 to vector<2x128xf32>
    %85 = arith.mulf %84, %83 : vector<2x128xf32>
    %86 = vector.extract_strided_slice %77 {offsets = [0, 128], sizes = [2, 128], strides = [1, 1]} : vector<2x512xf32> to vector<2x128xf32>
    %cst_45 = arith.constant 5.000000e-01 : f32
    %87 = vector.broadcast %cst_45 : f32 to vector<2x128xf32>
    %88 = arith.mulf %87, %86 : vector<2x128xf32>
    %89 = math.tanh %88 : vector<2x128xf32>
    %cst_46 = arith.constant 1.000000e+00 : f32
    %90 = vector.broadcast %cst_46 : f32 to vector<2x128xf32>
    %91 = arith.addf %89, %90 : vector<2x128xf32>
    %cst_47 = arith.constant 5.000000e-01 : f32
    %92 = vector.broadcast %cst_47 : f32 to vector<2x128xf32>
    %93 = arith.mulf %92, %91 : vector<2x128xf32>
    %94 = vector.extract_strided_slice %77 {offsets = [0, 256], sizes = [2, 128], strides = [1, 1]} : vector<2x512xf32> to vector<2x128xf32>
    %95 = math.tanh %94 : vector<2x128xf32>
    %96 = vector.extract_strided_slice %77 {offsets = [0, 384], sizes = [2, 128], strides = [1, 1]} : vector<2x512xf32> to vector<2x128xf32>
    %cst_48 = arith.constant 5.000000e-01 : f32
    %97 = vector.broadcast %cst_48 : f32 to vector<2x128xf32>
    %98 = arith.mulf %97, %96 : vector<2x128xf32>
    %99 = math.tanh %98 : vector<2x128xf32>
    %cst_49 = arith.constant 1.000000e+00 : f32
    %100 = vector.broadcast %cst_49 : f32 to vector<2x128xf32>
    %101 = arith.addf %99, %100 : vector<2x128xf32>
    %cst_50 = arith.constant 5.000000e-01 : f32
    %102 = vector.broadcast %cst_50 : f32 to vector<2x128xf32>
    %103 = arith.mulf %102, %101 : vector<2x128xf32>
    %104 = arith.mulf %93, %3 : vector<2x128xf32>
    %105 = arith.mulf %85, %95 : vector<2x128xf32>
    %106 = arith.addf %104, %105 : vector<2x128xf32>
    %107 = math.tanh %106 : vector<2x128xf32>
    %108 = arith.mulf %103, %107 : vector<2x128xf32>
    %c0_51 = arith.constant 0 : index
    %c0_52 = arith.constant 0 : index
    %109 = vector.load %arg15[%c0_51, %c0_52] : memref<2x128xf32, #tpu.memory_space<vmem>>, vector<2x128xf32>
    tpu.vector_store %arg15[%c0_51, %c0_52], %108 {strides = array<i32>} : memref<2x128xf32, #tpu.memory_space<vmem>>, vector<2x128xf32>,
    %c0_53 = arith.constant 0 : index
    %c0_54 = arith.constant 0 : index
    %110 = vector.load %arg16[%c0_53, %c0_54] : memref<2x128xf32, #tpu.memory_space<vmem>>, vector<2x128xf32>
    tpu.vector_store %arg16[%c0_53, %c0_54], %106 {strides = array<i32>} : memref<2x128xf32, #tpu.memory_space<vmem>>, vector<2x128xf32>,
    return
  }
  func.func @transform_0(%arg0: i32) -> (i32, i32, i32) {
    %c0_i32 = arith.constant 0 : i32
    %c0_i32_0 = arith.constant 0 : i32
    %c0_i32_1 = arith.constant 0 : i32
    return %arg0, %c0_i32, %c0_i32_0 : i32, i32, i32
  }
  func.func @transform_1(%arg0: i32) -> (i32, i32) {
    %c0_i32 = arith.constant 0 : i32
    %c0_i32_0 = arith.constant 0 : i32
    return %arg0, %c0_i32 : i32, i32
  }
  func.func @transform_2(%arg0: i32) -> (i32, i32) {
    %c0_i32 = arith.constant 0 : i32
    %c0_i32_0 = arith.constant 0 : i32
    return %arg0, %c0_i32 : i32, i32
  }
  func.func @transform_3(%arg0: i32) -> (i32, i32) {
    %c0_i32 = arith.constant 0 : i32
    %c0_i32_0 = arith.constant 0 : i32
    return %arg0, %c0_i32 : i32, i32
  }
  func.func @transform_4(%arg0: i32) -> (i32, i32) {
    %c0_i32 = arith.constant 0 : i32
    %c0_i32_0 = arith.constant 0 : i32
    %c0_i32_1 = arith.constant 0 : i32
    return %c0_i32, %c0_i32_0 : i32, i32
  }
  func.func @transform_5(%arg0: i32) -> (i32, i32) {
    %c0_i32 = arith.constant 0 : i32
    %c0_i32_0 = arith.constant 0 : i32
    %c0_i32_1 = arith.constant 0 : i32
    return %c0_i32, %c0_i32_0 : i32, i32
  }
  func.func @transform_6(%arg0: i32) -> (i32, i32) {
    %c0_i32 = arith.constant 0 : i32
    %c0_i32_0 = arith.constant 0 : i32
    %c0_i32_1 = arith.constant 0 : i32
    return %c0_i32, %c0_i32_0 : i32, i32
  }
  func.func @transform_7(%arg0: i32) -> (i32, i32) {
    %c0_i32 = arith.constant 0 : i32
    %c0_i32_0 = arith.constant 0 : i32
    %c0_i32_1 = arith.constant 0 : i32
    return %c0_i32, %c0_i32_0 : i32, i32
  }
  func.func @transform_8(%arg0: i32) -> (i32, i32) {
    %c0_i32 = arith.constant 0 : i32
    %c0_i32_0 = arith.constant 0 : i32
    %c0_i32_1 = arith.constant 0 : i32
    return %c0_i32, %c0_i32_0 : i32, i32
  }
  func.func @transform_9(%arg0: i32) -> (i32, i32) {
    %c0_i32 = arith.constant 0 : i32
    %c0_i32_0 = arith.constant 0 : i32
    %c0_i32_1 = arith.constant 0 : i32
    return %c0_i32, %c0_i32_0 : i32, i32
  }
  func.func @transform_10(%arg0: i32) -> (i32, i32) {
    %c0_i32 = arith.constant 0 : i32
    %c0_i32_0 = arith.constant 0 : i32
    %c0_i32_1 = arith.constant 0 : i32
    return %c0_i32, %c0_i32_0 : i32, i32
  }
  func.func @transform_11(%arg0: i32) -> (i32, i32) {
    %c0_i32 = arith.constant 0 : i32
    %c0_i32_0 = arith.constant 0 : i32
    %c0_i32_1 = arith.constant 0 : i32
    return %c0_i32, %c0_i32_0 : i32, i32
  }
  func.func @transform_12(%arg0: i32) -> (i32, i32) {
    %c0_i32 = arith.constant 0 : i32
    %c0_i32_0 = arith.constant 0 : i32
    %c0_i32_1 = arith.constant 0 : i32
    return %c0_i32, %c0_i32_0 : i32, i32
  }
  func.func @transform_13(%arg0: i32) -> (i32, i32) {
    %c0_i32 = arith.constant 0 : i32
    %c0_i32_0 = arith.constant 0 : i32
    return %arg0, %c0_i32 : i32, i32
  }
  func.func @transform_14(%arg0: i32) -> (i32, i32) {
    %c0_i32 = arith.constant 0 : i32
    %c0_i32_0 = arith.constant 0 : i32
    return %arg0, %c0_i32 : i32, i32
  }
  func.func @transform_15(%arg0: i32) -> (i32, i32) {
    %c0_i32 = arith.constant 0 : i32
    %c0_i32_0 = arith.constant 0 : i32
    return %arg0, %c0_i32 : i32, i32
  }
}

</mosaic_0001>

<llo_original>
// kernel: attention_decoder_forward.1
$region0: #{attention_decoder_forward.1}
  #allocation0 [shape = 'u32[]', space=smem, size = 0x4, offset = 0x4, fixed_abs, tag = 'smem constant byte address 0x4 - core index']
  #allocation1 [shape = 'u32[72,128]{1,0:T(1,128)}', space=vmem, size = 0x9000, scoped, tag = 'internal scratch']
  #allocation2 [shape = 'f32[1,1]{1,0:T(1,128)S(6)}', space=smem, size = 0x200, scoped, tag = 'scoped memory for attention_decoder_forward.1']
  %s0 = inlined_call_operand.vmem [shape: bf16[2,8,128], index: 0, kind: input, shape index: {}]
  %s1 = inlined_call_operand.vmem [shape: f32[2,128], index: 1, kind: input, shape index: {}, may-alias: {1,14}]
  %s2 = inlined_call_operand.vmem [shape: f32[2,128], index: 2, kind: input, shape index: {}, may-alias: {2,15}]
  %s3 = inlined_call_operand.vmem [shape: bf16[2,128], index: 3, kind: input, shape index: {}]
  %s4 = inlined_call_operand.vmem [shape: bf16[128,128], index: 4, kind: input, shape index: {}]
  %s5 = inlined_call_operand.hbm [shape: bf16[128,640], index: 5, kind: input, shape index: {}]
  %s6 = inlined_call_operand.vmem [shape: f32[1,128], index: 6, kind: input, shape index: {}]
  %s7 = inlined_call_operand.vmem [shape: f32[1,128], index: 7, kind: input, shape index: {}]
  %s8 = inlined_call_operand.<no memory space> [shape: f32[1,1], index: 8, kind: input, shape index: {}]
  %s9 = inlined_call_operand.vmem [shape: bf16[256,64], index: 9, kind: input, shape index: {}]
  %s10 = inlined_call_operand.vmem [shape: f32[1,64], index: 10, kind: input, shape index: {}]
  %s11 = inlined_call_operand.vmem [shape: bf16[64,512], index: 11, kind: input, shape index: {}]
  %s12 = inlined_call_operand.vmem [shape: f32[1,512], index: 12, kind: input, shape index: {}]
  %s13 = inlined_call_operand.hbm [shape: f32[2,8], index: 13, kind: output, shape index: {0}]
  %s14 = inlined_call_operand.vmem [shape: f32[2,128], index: 14, kind: output, shape index: {1}, may-alias: {1,14}]
  %s15 = inlined_call_operand.vmem [shape: f32[2,128], index: 15, kind: output, shape index: {2}, may-alias: {2,15}]
  %16 = xla_tuple %s13, %s14, %s15
  %s17 = sld [smem:[#allocation0]]
  $region82: #{attention_decoder_forward.1} parent=0
    _
  %s19 = ssub.s32 1, %s17
  %s20 = scalar_select 0, %s19, %s17
  %21 = sst [smem:[#allocation2]] %s8
  $region1: #{attention_decoder_forward.1} parent=0
    #allocation3 [shape = 'u8[163840]{0}', space=vmem, size = 0x28000, scoped, tag = 'input window, operand 5, single buffered']
    #allocation4 [shape = 's32[1]{0}', space=sflag, size = 0x4, scoped, tag = 'scoped memory for attention_decoder_forward.1']
    #allocation5 [shape = 's32[1]{0}', space=sflag, size = 0x4, scoped, tag = 'scoped memory for attention_decoder_forward.1']
    #allocation6 [shape = 'u8[1024]{0}', space=vmem, size = 0x400, scoped, tag = 'output window, operand 0, single buffered']
    %22 = vsyncpa [#allocation4], 0
    %23 = vsyncpa [#allocation5], 0
    // Predicated region
    $region2: #{attention_decoder_forward.1} parent=1 // pred_check
      _
    $region3: #{attention_decoder_forward.1} parent=1 // pred_check_branch
      %25 = sbr.rel (0) target = $region5
    $region4: #{attention_decoder_forward.1} parent=1 // pred_region
      _
    $region5: #{attention_decoder_forward.1} parent=1 // pred_fallthru
      _
    // Predicated region
    $region6: #{attention_decoder_forward.1} parent=1 // pred_check
      _
    $region7: #{attention_decoder_forward.1} parent=1 // pred_check_branch
      %27 = sbr.rel (0) target = $region9
    $region8: #{attention_decoder_forward.1} parent=1 // pred_region
      _
    $region9: #{attention_decoder_forward.1} parent=1 // pred_fallthru
      _
    // Predicated region
    $region10: #{attention_decoder_forward.1} parent=1 // pred_check
      _
    $region11: #{attention_decoder_forward.1} parent=1 // pred_check_branch
      %29 = sbr.rel (0) target = $region13
    $region12: #{attention_decoder_forward.1} parent=1 // pred_region
      _
    $region13: #{attention_decoder_forward.1} parent=1 // pred_fallthru
      _
    // Predicated region
    $region14: #{attention_decoder_forward.1} parent=1 // pred_check
      _
    $region15: #{attention_decoder_forward.1} parent=1 // pred_check_branch
      %31 = sbr.rel (0) target = $region17
    $region16: #{attention_decoder_forward.1} parent=1 // pred_region
      _
    $region17: #{attention_decoder_forward.1} parent=1 // pred_fallthru
      _
    // Predicated region
    $region18: #{attention_decoder_forward.1} parent=1 // pred_check
      _
    $region19: #{attention_decoder_forward.1} parent=1 // pred_check_branch
      %33 = sbr.rel (0) target = $region21
    $region20: #{attention_decoder_forward.1} parent=1 // pred_region
      _
    $region21: #{attention_decoder_forward.1} parent=1 // pred_fallthru
      _
    // Predicated region
    $region22: #{attention_decoder_forward.1} parent=1 // pred_check
      _
    $region23: #{attention_decoder_forward.1} parent=1 // pred_check_branch
      %35 = sbr.rel (0) target = $region25
    $region24: #{attention_decoder_forward.1} parent=1 // pred_region
      %37 = vsyncadd [#allocation4], 0
      %s38 = sshll.u32 %s5, 4
      %s39 = int_to_ptr.hbm [resolvable:$true] %s38
      %s40 = sshll.u32 [#allocation3], 4
      %s41 = int_to_ptr.vmem [resolvable:$true] %s40
      %46 = dma.hbm_to_vmem [thread:$0]  %s39, 5120, %s41, [#allocation4], 320, 320, 20
    $region25: #{attention_decoder_forward.1} parent=1 // pred_fallthru
      _
    // Predicated region
    $region26: #{attention_decoder_forward.1} parent=1 // pred_check
      _
    $region27: #{attention_decoder_forward.1} parent=1 // pred_check_branch
      %48 = sbr.rel (0) target = $region29
    $region28: #{attention_decoder_forward.1} parent=1 // pred_region
      _
    $region29: #{attention_decoder_forward.1} parent=1 // pred_fallthru
      _
    // Predicated region
    $region30: #{attention_decoder_forward.1} parent=1 // pred_check
      _
    $region31: #{attention_decoder_forward.1} parent=1 // pred_check_branch
      %50 = sbr.rel (0) target = $region33
    $region32: #{attention_decoder_forward.1} parent=1 // pred_region
      _
    $region33: #{attention_decoder_forward.1} parent=1 // pred_fallthru
      _
    // Predicated region
    $region34: #{attention_decoder_forward.1} parent=1 // pred_check
      _
    $region35: #{attention_decoder_forward.1} parent=1 // pred_check_branch
      %52 = sbr.rel (0) target = $region37
    $region36: #{attention_decoder_forward.1} parent=1 // pred_region
      _
    $region37: #{attention_decoder_forward.1} parent=1 // pred_fallthru
      _
    // Predicated region
    $region38: #{attention_decoder_forward.1} parent=1 // pred_check
      _
    $region39: #{attention_decoder_forward.1} parent=1 // pred_check_branch
      %54 = sbr.rel (0) target = $region41
    $region40: #{attention_decoder_forward.1} parent=1 // pred_region
      _
    $region41: #{attention_decoder_forward.1} parent=1 // pred_fallthru
      _
    // Predicated region
    $region42: #{attention_decoder_forward.1} parent=1 // pred_check
      _
    $region43: #{attention_decoder_forward.1} parent=1 // pred_check_branch
      %56 = sbr.rel (0) target = $region45
    $region44: #{attention_decoder_forward.1} parent=1 // pred_region
      _
    $region45: #{attention_decoder_forward.1} parent=1 // pred_fallthru
      _
    // Predicated region
    $region46: #{attention_decoder_forward.1} parent=1 // pred_check
      _
    $region47: #{attention_decoder_forward.1} parent=1 // pred_check_branch
      %58 = sbr.rel (0) target = $region49
    $region48: #{attention_decoder_forward.1} parent=1 // pred_region
      _
    $region49: #{attention_decoder_forward.1} parent=1 // pred_fallthru
      _
    // Predicated region
    $region50: #{attention_decoder_forward.1} parent=1 // pred_check
      _
    $region51: #{attention_decoder_forward.1} parent=1 // pred_check_branch
      %60 = sbr.rel (0) target = $region53
    $region52: #{attention_decoder_forward.1} parent=1 // pred_region
      _
    $region53: #{attention_decoder_forward.1} parent=1 // pred_fallthru
      _
    // Predicated region
    $region54: #{attention_decoder_forward.1} parent=1 // pred_check
      _
    $region55: #{attention_decoder_forward.1} parent=1 // pred_check_branch
      %62 = sbr.rel (0) target = $region57
    $region56: #{attention_decoder_forward.1} parent=1 // pred_region
      %64 = dma.done [#allocation4], 5120
    $region57: #{attention_decoder_forward.1} parent=1 // pred_fallthru
      _
    %v66 = vld [vmem:[%s0] sm:$0xf]
    %v67 = vld [vmem:[%s0 + $0x4] sm:$0xf]
    %v68 = vunpack.c.l.bf16 %v66
    %v69 = vunpack.c.l.bf16 %v67
    %v70 = vld [vmem:[%s1] sm:$0x3]
    %v71 = vld [vmem:[%s2] sm:$0x3]
    %v72 = vpack.c.bf16 %v70, %v70
    %v73 = vld [vmem:[#allocation3] sm:$0xff]
    %v74 = vld [vmem:[#allocation3 + $0x8] sm:$0xff]
    %v75 = vld [vmem:[#allocation3 + $0x10] sm:$0xf]
    %v76 = vld [vmem:[#allocation3 + $0x14] sm:$0xff]
    %v77 = vld [vmem:[#allocation3 + $0x1c] sm:$0xff]
    %v78 = vld [vmem:[#allocation3 + $0x24] sm:$0xf]
    %v79 = vld [vmem:[#allocation3 + $0x28] sm:$0xff]
    %v80 = vld [vmem:[#allocation3 + $0x30] sm:$0xff]
    %v81 = vld [vmem:[#allocation3 + $0x38] sm:$0xf]
    %v82 = vld [vmem:[#allocation3 + $0x3c] sm:$0xff]
    %v83 = vld [vmem:[#allocation3 + $0x44] sm:$0xff]
    %v84 = vld [vmem:[#allocation3 + $0x4c] sm:$0xf]
    %v85 = vld [vmem:[#allocation3 + $0x50] sm:$0xff]
    %v86 = vld [vmem:[#allocation3 + $0x58] sm:$0xff]
    %v87 = vld [vmem:[#allocation3 + $0x60] sm:$0xf]
    %v88 = vld [vmem:[#allocation3 + $0x64] sm:$0xff]
    %v89 = vld [vmem:[#allocation3 + $0x6c] sm:$0xff]
    %v90 = vld [vmem:[#allocation3 + $0x74] sm:$0xf]
    %v91 = vld [vmem:[#allocation3 + $0x78] sm:$0xff]
    %v92 = vld [vmem:[#allocation3 + $0x80] sm:$0xff]
    %v93 = vld [vmem:[#allocation3 + $0x88] sm:$0xf]
    %v94 = vld [vmem:[#allocation3 + $0x8c] sm:$0xff]
    %v95 = vld [vmem:[#allocation3 + $0x94] sm:$0xff]
    %v96 = vld [vmem:[#allocation3 + $0x9c] sm:$0xf]
    %v97 = vld [vmem:[#allocation3 + $0xa0] sm:$0xff]
    %v98 = vld [vmem:[#allocation3 + $0xa8] sm:$0xff]
    %v99 = vld [vmem:[#allocation3 + $0xb0] sm:$0xf]
    %v100 = vld [vmem:[#allocation3 + $0xb4] sm:$0xff]
    %v101 = vld [vmem:[#allocation3 + $0xbc] sm:$0xff]
    %v102 = vld [vmem:[#allocation3 + $0xc4] sm:$0xf]
    %v103 = vld [vmem:[#allocation3 + $0xc8] sm:$0xff]
    %v104 = vld [vmem:[#allocation3 + $0xd0] sm:$0xff]
    %v105 = vld [vmem:[#allocation3 + $0xd8] sm:$0xf]
    %v106 = vld [vmem:[#allocation3 + $0xdc] sm:$0xff]
    %v107 = vld [vmem:[#allocation3 + $0xe4] sm:$0xff]
    %v108 = vld [vmem:[#allocation3 + $0xec] sm:$0xf]
    %v109 = vld [vmem:[#allocation3 + $0xf0] sm:$0xff]
    %v110 = vld [vmem:[#allocation3 + $0xf8] sm:$0xff]
    %v111 = vld [vmem:[#allocation3 + $0x100] sm:$0xf]
    %v112 = vld [vmem:[#allocation3 + $0x104] sm:$0xff]
    %v113 = vld [vmem:[#allocation3 + $0x10c] sm:$0xff]
    %v114 = vld [vmem:[#allocation3 + $0x114] sm:$0xf]
    %v115 = vld [vmem:[#allocation3 + $0x118] sm:$0xff]
    %v116 = vld [vmem:[#allocation3 + $0x120] sm:$0xff]
    %v117 = vld [vmem:[#allocation3 + $0x128] sm:$0xf]
    %v118 = vld [vmem:[#allocation3 + $0x12c] sm:$0xff]
    %v119 = vld [vmem:[#allocation3 + $0x134] sm:$0xff]
    %v120 = vld [vmem:[#allocation3 + $0x13c] sm:$0xf]
    %v169 = vunpack.c.l.b16 %v73
    %v170 = vunpack.c.h.b16 %v73
    %v171 = vunpack.c.l.b16 %v74
    %v172 = vunpack.c.h.b16 %v74
    %v173 = vunpack.c.l.b16 %v75
    %v174 = vunpack.c.l.b16 %v76
    %v175 = vunpack.c.h.b16 %v76
    %v176 = vunpack.c.l.b16 %v77
    %v177 = vunpack.c.h.b16 %v77
    %v178 = vunpack.c.l.b16 %v78
    %v179 = vunpack.c.l.b16 %v79
    %v180 = vunpack.c.h.b16 %v79
    %v181 = vunpack.c.l.b16 %v80
    %v182 = vunpack.c.h.b16 %v80
    %v183 = vunpack.c.l.b16 %v81
    %v184 = vunpack.c.l.b16 %v82
    %v185 = vunpack.c.h.b16 %v82
    %v186 = vunpack.c.l.b16 %v83
    %v187 = vunpack.c.h.b16 %v83
    %v188 = vunpack.c.l.b16 %v84
    %v189 = vunpack.c.l.b16 %v85
    %v190 = vunpack.c.h.b16 %v85
    %v191 = vunpack.c.l.b16 %v86
    %v192 = vunpack.c.h.b16 %v86
    %v193 = vunpack.c.l.b16 %v87
    %v194 = vunpack.c.l.b16 %v88
    %v195 = vunpack.c.h.b16 %v88
    %v196 = vunpack.c.l.b16 %v89
    %v197 = vunpack.c.h.b16 %v89
    %v198 = vunpack.c.l.b16 %v90
    %v199 = vunpack.c.l.b16 %v91
    %v200 = vunpack.c.h.b16 %v91
    %v201 = vunpack.c.l.b16 %v92
    %v202 = vunpack.c.h.b16 %v92
    %v203 = vunpack.c.l.b16 %v93
    %v204 = vunpack.c.l.b16 %v94
    %v205 = vunpack.c.h.b16 %v94
    %v206 = vunpack.c.l.b16 %v95
    %v207 = vunpack.c.h.b16 %v95
    %v208 = vunpack.c.l.b16 %v96
    %v209 = vunpack.c.l.b16 %v97
    %v210 = vunpack.c.h.b16 %v97
    %v211 = vunpack.c.l.b16 %v98
    %v212 = vunpack.c.h.b16 %v98
    %v213 = vunpack.c.l.b16 %v99
    %v214 = vunpack.c.l.b16 %v100
    %v215 = vunpack.c.h.b16 %v100
    %v216 = vunpack.c.l.b16 %v101
    %v217 = vunpack.c.h.b16 %v101
    %v218 = vunpack.c.l.b16 %v102
    %v219 = vunpack.c.l.b16 %v103
    %v220 = vunpack.c.h.b16 %v103
    %v221 = vunpack.c.l.b16 %v104
    %v222 = vunpack.c.h.b16 %v104
    %v223 = vunpack.c.l.b16 %v105
    %v224 = vunpack.c.l.b16 %v106
    %v225 = vunpack.c.h.b16 %v106
    %v226 = vunpack.c.l.b16 %v107
    %v227 = vunpack.c.h.b16 %v107
    %v228 = vunpack.c.l.b16 %v108
    %v229 = vunpack.c.l.b16 %v109
    %v230 = vunpack.c.h.b16 %v109
    %v231 = vunpack.c.l.b16 %v110
    %v232 = vunpack.c.h.b16 %v110
    %v233 = vunpack.c.l.b16 %v111
    %v234 = vunpack.c.l.b16 %v112
    %v235 = vunpack.c.h.b16 %v112
    %v236 = vunpack.c.l.b16 %v113
    %v237 = vunpack.c.h.b16 %v113
    %v238 = vunpack.c.l.b16 %v114
    %v239 = vunpack.c.l.b16 %v115
    %v240 = vunpack.c.h.b16 %v115
    %v241 = vunpack.c.l.b16 %v116
    %v242 = vunpack.c.h.b16 %v116
    %v243 = vunpack.c.l.b16 %v117
    %v244 = vunpack.c.l.b16 %v118
    %v245 = vunpack.c.h.b16 %v118
    %v246 = vunpack.c.l.b16 %v119
    %v247 = vunpack.c.h.b16 %v119
    %v248 = vunpack.c.l.b16 %v120
    %v249 = vpack.c.b16 %v174, %v169
    %v250 = vpack.c.b16 %v175, %v170
    %v251 = vpack.c.b16 %v176, %v171
    %v252 = vpack.c.b16 %v177, %v172
    %v253 = vpack.c.b16 %v178, %v173
    %v254 = vpack.c.b16 %v184, %v179
    %v255 = vpack.c.b16 %v185, %v180
    %v256 = vpack.c.b16 %v186, %v181
    %v257 = vpack.c.b16 %v187, %v182
    %v258 = vpack.c.b16 %v188, %v183
    %v259 = vpack.c.b16 %v194, %v189
    %v260 = vpack.c.b16 %v195, %v190
    %v261 = vpack.c.b16 %v196, %v191
    %v262 = vpack.c.b16 %v197, %v192
    %v263 = vpack.c.b16 %v198, %v193
    %v264 = vpack.c.b16 %v204, %v199
    %v265 = vpack.c.b16 %v205, %v200
    %v266 = vpack.c.b16 %v206, %v201
    %v267 = vpack.c.b16 %v207, %v202
    %v268 = vpack.c.b16 %v208, %v203
    %v269 = vpack.c.b16 %v214, %v209
    %v270 = vpack.c.b16 %v215, %v210
    %v271 = vpack.c.b16 %v216, %v211
    %v272 = vpack.c.b16 %v217, %v212
    %v273 = vpack.c.b16 %v218, %v213
    %v274 = vpack.c.b16 %v224, %v219
    %v275 = vpack.c.b16 %v225, %v220
    %v276 = vpack.c.b16 %v226, %v221
    %v277 = vpack.c.b16 %v227, %v222
    %v278 = vpack.c.b16 %v228, %v223
    %v279 = vpack.c.b16 %v234, %v229
    %v280 = vpack.c.b16 %v235, %v230
    %v281 = vpack.c.b16 %v236, %v231
    %v282 = vpack.c.b16 %v237, %v232
    %v283 = vpack.c.b16 %v238, %v233
    %v284 = vpack.c.b16 %v244, %v239
    %v285 = vpack.c.b16 %v245, %v240
    %v286 = vpack.c.b16 %v246, %v241
    %v287 = vpack.c.b16 %v247, %v242
    %v288 = vpack.c.b16 %v248, %v243
    %329 = vmatpush.bf16.msra.mxu0 %v284
    %330 = vmatpush.bf16.msra.mxu0 %v279
    %331 = vmatpush.bf16.msra.mxu0 %v274
    %332 = vmatpush.bf16.msra.mxu0 %v269
    %333 = vmatpush.bf16.msra.mxu0 %v264
    %334 = vmatpush.bf16.msra.mxu0 %v259
    %335 = vmatpush.bf16.msra.mxu0 %v254
    %336 = vmatpush.bf16.msra.mxu0 %v249
    %337 = vmatmul.bf16.gmra.mxu0 %v72
    %v338 = vpop.f32.mrf.mxu0
    %v339 = vadd.f32 0.0, %v338
    %v340 = vpop.f32.mrf.mxu0
    %341 = vdwg.mxu0
    %342 = vmatpush.bf16.msra.mxu0 %v285
    %343 = vmatpush.bf16.msra.mxu0 %v280
    %344 = vmatpush.bf16.msra.mxu0 %v275
    %345 = vmatpush.bf16.msra.mxu0 %v270
    %346 = vmatpush.bf16.msra.mxu0 %v265
    %347 = vmatpush.bf16.msra.mxu0 %v260
    %348 = vmatpush.bf16.msra.mxu0 %v255
    %349 = vmatpush.bf16.msra.mxu0 %v250
    %350 = vmatmul.bf16.gmra.mxu0 %v72
    %v351 = vpop.f32.mrf.mxu0
    %v352 = vadd.f32 0.0, %v351
    %v353 = vpop.f32.mrf.mxu0
    %354 = vdwg.mxu0
    %355 = vmatpush.bf16.msra.mxu0 %v286
    %356 = vmatpush.bf16.msra.mxu0 %v281
    %357 = vmatpush.bf16.msra.mxu0 %v276
    %358 = vmatpush.bf16.msra.mxu0 %v271
    %359 = vmatpush.bf16.msra.mxu0 %v266
    %360 = vmatpush.bf16.msra.mxu0 %v261
    %361 = vmatpush.bf16.msra.mxu0 %v256
    %362 = vmatpush.bf16.msra.mxu0 %v251
    %363 = vmatmul.bf16.gmra.mxu0 %v72
    %v364 = vpop.f32.mrf.mxu0
    %v365 = vadd.f32 0.0, %v364
    %v366 = vpop.f32.mrf.mxu0
    %367 = vdwg.mxu0
    %368 = vmatpush.bf16.msra.mxu0 %v287
    %369 = vmatpush.bf16.msra.mxu0 %v282
    %370 = vmatpush.bf16.msra.mxu0 %v277
    %371 = vmatpush.bf16.msra.mxu0 %v272
    %372 = vmatpush.bf16.msra.mxu0 %v267
    %373 = vmatpush.bf16.msra.mxu0 %v262
    %374 = vmatpush.bf16.msra.mxu0 %v257
    %375 = vmatpush.bf16.msra.mxu0 %v252
    %376 = vmatmul.bf16.gmra.mxu0 %v72
    %v377 = vpop.f32.mrf.mxu0
    %v378 = vadd.f32 0.0, %v377
    %v379 = vpop.f32.mrf.mxu0
    %380 = vdwg.mxu0
    %381 = vmatpush.bf16.msra.mxu0 %v288
    %382 = vmatpush.bf16.msra.mxu0 %v283
    %383 = vmatpush.bf16.msra.mxu0 %v278
    %384 = vmatpush.bf16.msra.mxu0 %v273
    %385 = vmatpush.bf16.msra.mxu0 %v268
    %386 = vmatpush.bf16.msra.mxu0 %v263
    %387 = vmatpush.bf16.msra.mxu0 %v258
    %388 = vmatpush.bf16.msra.mxu0 %v253
    %389 = vmatmul.bf16.gmra.mxu0 %v72
    %v390 = vpop.f32.mrf.mxu0
    %v391 = vadd.f32 0.0, %v390
    %v392 = vpop.f32.mrf.mxu0
    %393 = vdwg.mxu0
    %v394 = vld [vmem:[%s6] sm:$0x1]
    %v396 = vperm.slane %v394, 0
    %v398 = vadd.f32 %v339, %v396
    %v399 = vpack.c.bf16 %v69, %v68
    %v400 = vld [vmem:[%s4] sm:$0xf]
    %v401 = vld [vmem:[%s4 + $0x4] sm:$0xf]
    %v402 = vld [vmem:[%s4 + $0x8] sm:$0xf]
    %v403 = vld [vmem:[%s4 + $0xc] sm:$0xf]
    %v404 = vld [vmem:[%s4 + $0x10] sm:$0xf]
    %v405 = vld [vmem:[%s4 + $0x14] sm:$0xf]
    %v406 = vld [vmem:[%s4 + $0x18] sm:$0xf]
    %v407 = vld [vmem:[%s4 + $0x1c] sm:$0xf]
    %v408 = vld [vmem:[%s4 + $0x20] sm:$0xf]
    %v409 = vld [vmem:[%s4 + $0x24] sm:$0xf]
    %v410 = vld [vmem:[%s4 + $0x28] sm:$0xf]
    %v411 = vld [vmem:[%s4 + $0x2c] sm:$0xf]
    %v412 = vld [vmem:[%s4 + $0x30] sm:$0xf]
    %v413 = vld [vmem:[%s4 + $0x34] sm:$0xf]
    %v414 = vld [vmem:[%s4 + $0x38] sm:$0xf]
    %v415 = vld [vmem:[%s4 + $0x3c] sm:$0xf]
    %v432 = vunpack.c.l.b16 %v400
    %v433 = vunpack.c.l.b16 %v401
    %v434 = vunpack.c.l.b16 %v402
    %v435 = vunpack.c.l.b16 %v403
    %v436 = vunpack.c.l.b16 %v404
    %v437 = vunpack.c.l.b16 %v405
    %v438 = vunpack.c.l.b16 %v406
    %v439 = vunpack.c.l.b16 %v407
    %v440 = vunpack.c.l.b16 %v408
    %v441 = vunpack.c.l.b16 %v409
    %v442 = vunpack.c.l.b16 %v410
    %v443 = vunpack.c.l.b16 %v411
    %v444 = vunpack.c.l.b16 %v412
    %v445 = vunpack.c.l.b16 %v413
    %v446 = vunpack.c.l.b16 %v414
    %v447 = vunpack.c.l.b16 %v415
    %v448 = vpack.c.b16 %v433, %v432
    %v449 = vpack.c.b16 %v435, %v434
    %v450 = vpack.c.b16 %v437, %v436
    %v451 = vpack.c.b16 %v439, %v438
    %v452 = vpack.c.b16 %v441, %v440
    %v453 = vpack.c.b16 %v443, %v442
    %v454 = vpack.c.b16 %v445, %v444
    %v455 = vpack.c.b16 %v447, %v446
    %464 = vmatpush.bf16.msra.mxu0 %v455
    %465 = vmatpush.bf16.msra.mxu0 %v454
    %466 = vmatpush.bf16.msra.mxu0 %v453
    %467 = vmatpush.bf16.msra.mxu0 %v452
    %468 = vmatpush.bf16.msra.mxu0 %v451
    %469 = vmatpush.bf16.msra.mxu0 %v450
    %470 = vmatpush.bf16.msra.mxu0 %v449
    %471 = vmatpush.bf16.msra.mxu0 %v448
    %472 = vmatmul.bf16.gmra.mxu0 %v399
    %v473 = vpop.f32.mrf.mxu0
    %v474 = vadd.f32 0.0, %v473
    %v475 = vpop.f32.mrf.mxu0
    %v476 = vadd.f32 0.0, %v475
    %477 = vdwg.mxu0
    %v479 = vrot.slane %v398, 1
    %v480 = vperm.slane %v398, 0
    %v481 = vperm.slane %v479, 0
    %v484 = vadd.f32 %v474, %v480
    %v485 = vadd.f32 %v476, %v481
    %vm486 = vcmp.ge.f32.partialorder %v484, 0.0
    %vm487 = vcmp.ge.f32.partialorder %v485, 0.0
    %v488 = vmul.f32 %v484, 0.01
    %v489 = vmul.f32 %v485, 0.01
    %v490 = vsel %vm486, %v484, %v488
    %v491 = vsel %vm487, %v485, %v489
    %v492 = vld [vmem:[%s7] sm:$0x1]
    %v494 = vperm.slane %v492, 0
    %v496 = vmul.f32 %v490, %v494
    %v497 = vmul.f32 %v491, %v494
    %498 = vadd.xlane.f32.xlu0 %v496
    %v499 = vpop.xlane.xlu0 %498
    %500 = vadd.xlane.f32.xlu0 %v497
    %v501 = vpop.xlane.xlu0 %500
    %s502 = sld [smem:[#allocation2]]
    %v503 = vstv %s502
    %v504 = vadd.f32 %v499, %v503
    %v505 = vadd.f32 %v501, %v503
    %vm506 = vcmp.ge.f32.partialorder %v504, 0.0
    %vm507 = vcmp.ge.f32.partialorder %v505, 0.0
    %v508 = vmul.f32 %v504, 0.01
    %v509 = vmul.f32 %v505, 0.01
    %v510 = vsel %vm506, %v504, %v508
    %v511 = vsel %vm507, %v505, %v509
    %v512 = vlaneseq
    %v513 = vand.u32 %v512, 127
    %vm514 = vcmp.lt.s32.totalorder %v513, 6
    %v517 = vperm.slane %v510, %v513
    %v518 = vperm.slane %v511, %v513
    %vm519 = vcmask 1041409
    %v520 = vsel %vm519, %v518, %v517
    %v522 = vsel %vm514, %v520, -1e+30
    %vm523 = vcmask 58368
    %v524 = vsel %vm523, %v522, -inf
    %525 = vmax.xlane.f32.xlu0 %v524
    %v526 = vpop.xlane.xlu0 %525
    %v527 = vsub.f32 %v522, %v526
    %v528 = vmul.f32 %v527, 1.442695
    %v529 = vpow.pop %v528
    %v530 = vsel %vm523, %v529, 0.0
    %531 = vadd.xlane.f32.xlu0 %v530
    %v532 = vpop.xlane.xlu0 %531
    %v533 = vrcp.pop %v532
    %v534 = vmul.f32 %v529, %v533
    %535 = vst.msk [vmem:[#allocation6] sm:$0x3] %vm523, %v534
    %v536 = vperm.slane %v534, 0
    %v537 = vlaneseq
    %v538 = vshrl.u32 %v537, 7
    %540 = vset.pattern.permute.xlu0 %v538
    %541 = vperm.xlu0 %540, %v536
    %v542 = vpop.permute.xlu0 %541
    %v543 = vperm.slane %v534, 1
    %v544 = vlaneseq
    %v545 = vshrl.u32 %v544, 7
    %547 = vset.pattern.permute.xlu0 %v545
    %548 = vperm.xlu0 %547, %v543
    %v549 = vpop.permute.xlu0 %548
    %v550 = vmul.f32 %v542, %v68
    %v551 = vmul.f32 %v549, %v69
    %v552 = vrot.slane %v550, 4
    %v553 = vadd.f32 %v550, %v552
    %v554 = vrot.slane %v553, 2
    %v555 = vadd.f32 %v553, %v554
    %v556 = vrot.slane %v555, 1
    %v557 = vadd.f32 %v555, %v556
    %v558 = vrot.slane %v551, 4
    %v559 = vadd.f32 %v551, %v558
    %v560 = vrot.slane %v559, 2
    %v561 = vadd.f32 %v559, %v560
    %v562 = vrot.slane %v561, 1
    %v563 = vadd.f32 %v561, %v562
    %v564 = vld [vmem:[%s3] sm:$0x1]
    %v565 = vpack.c.bf16 %v557, %v557
    %v566 = vpack.c.bf16 %v563, %v563
    %v569 = vperm.slane %v565, 0
    %v570 = vperm.slane %v566, 0
    %v571 = vunpack.c.l.b16 %v569
    %v572 = vunpack.c.l.b16 %v570
    %v573 = vsel %vm519, %v572, %v571
    %v574 = vpack.c.b16 %v573, %v573
    %v576 = vld [vmem:[%s9] sm:$0xf]
    %v577 = vld [vmem:[%s9 + $0x4] sm:$0xf]
    %v578 = vld [vmem:[%s9 + $0x8] sm:$0xf]
    %v579 = vld [vmem:[%s9 + $0xc] sm:$0xf]
    %v580 = vld [vmem:[%s9 + $0x10] sm:$0xf]
    %v581 = vld [vmem:[%s9 + $0x14] sm:$0xf]
    %v582 = vld [vmem:[%s9 + $0x18] sm:$0xf]
    %v583 = vld [vmem:[%s9 + $0x1c] sm:$0xf]
    %v584 = vld [vmem:[%s9 + $0x20] sm:$0xf]
    %v585 = vld [vmem:[%s9 + $0x24] sm:$0xf]
    %v586 = vld [vmem:[%s9 + $0x28] sm:$0xf]
    %v587 = vld [vmem:[%s9 + $0x2c] sm:$0xf]
    %v588 = vld [vmem:[%s9 + $0x30] sm:$0xf]
    %v589 = vld [vmem:[%s9 + $0x34] sm:$0xf]
    %v590 = vld [vmem:[%s9 + $0x38] sm:$0xf]
    %v591 = vld [vmem:[%s9 + $0x3c] sm:$0xf]
    %v592 = vld [vmem:[%s9 + $0x40] sm:$0xf]
    %v593 = vld [vmem:[%s9 + $0x44] sm:$0xf]
    %v594 = vld [vmem:[%s9 + $0x48] sm:$0xf]
    %v595 = vld [vmem:[%s9 + $0x4c] sm:$0xf]
    %v596 = vld [vmem:[%s9 + $0x50] sm:$0xf]
    %v597 = vld [vmem:[%s9 + $0x54] sm:$0xf]
    %v598 = vld [vmem:[%s9 + $0x58] sm:$0xf]
    %v599 = vld [vmem:[%s9 + $0x5c] sm:$0xf]
    %v600 = vld [vmem:[%s9 + $0x60] sm:$0xf]
    %v601 = vld [vmem:[%s9 + $0x64] sm:$0xf]
    %v602 = vld [vmem:[%s9 + $0x68] sm:$0xf]
    %v603 = vld [vmem:[%s9 + $0x6c] sm:$0xf]
    %v604 = vld [vmem:[%s9 + $0x70] sm:$0xf]
    %v605 = vld [vmem:[%s9 + $0x74] sm:$0xf]
    %v606 = vld [vmem:[%s9 + $0x78] sm:$0xf]
    %v607 = vld [vmem:[%s9 + $0x7c] sm:$0xf]
    %v608 = vld [vmem:[%s10] sm:$0x1]
    %v610 = vperm.slane %v608, 0
    %v644 = vunpack.c.l.b16 %v576
    %v645 = vunpack.c.l.b16 %v577
    %v646 = vunpack.c.l.b16 %v578
    %v647 = vunpack.c.l.b16 %v579
    %v648 = vunpack.c.l.b16 %v580
    %v649 = vunpack.c.l.b16 %v581
    %v650 = vunpack.c.l.b16 %v582
    %v651 = vunpack.c.l.b16 %v583
    %v652 = vunpack.c.l.b16 %v584
    %v653 = vunpack.c.l.b16 %v585
    %v654 = vunpack.c.l.b16 %v586
    %v655 = vunpack.c.l.b16 %v587
    %v656 = vunpack.c.l.b16 %v588
    %v657 = vunpack.c.l.b16 %v589
    %v658 = vunpack.c.l.b16 %v590
    %v659 = vunpack.c.l.b16 %v591
    %v660 = vunpack.c.l.b16 %v592
    %v661 = vunpack.c.l.b16 %v593
    %v662 = vunpack.c.l.b16 %v594
    %v663 = vunpack.c.l.b16 %v595
    %v664 = vunpack.c.l.b16 %v596
    %v665 = vunpack.c.l.b16 %v597
    %v666 = vunpack.c.l.b16 %v598
    %v667 = vunpack.c.l.b16 %v599
    %v668 = vunpack.c.l.b16 %v600
    %v669 = vunpack.c.l.b16 %v601
    %v670 = vunpack.c.l.b16 %v602
    %v671 = vunpack.c.l.b16 %v603
    %v672 = vunpack.c.l.b16 %v604
    %v673 = vunpack.c.l.b16 %v605
    %v674 = vunpack.c.l.b16 %v606
    %v675 = vunpack.c.l.b16 %v607
    %v676 = vpack.c.b16 %v645, %v644
    %v677 = vpack.c.b16 %v647, %v646
    %v678 = vpack.c.b16 %v649, %v648
    %v679 = vpack.c.b16 %v651, %v650
    %v680 = vpack.c.b16 %v653, %v652
    %v681 = vpack.c.b16 %v655, %v654
    %v682 = vpack.c.b16 %v657, %v656
    %v683 = vpack.c.b16 %v659, %v658
    %v684 = vpack.c.b16 %v661, %v660
    %v685 = vpack.c.b16 %v663, %v662
    %v686 = vpack.c.b16 %v665, %v664
    %v687 = vpack.c.b16 %v667, %v666
    %v688 = vpack.c.b16 %v669, %v668
    %v689 = vpack.c.b16 %v671, %v670
    %v690 = vpack.c.b16 %v673, %v672
    %v691 = vpack.c.b16 %v675, %v674
    %708 = vmatpush.bf16.msra.mxu0 %v683
    %709 = vmatpush.bf16.msra.mxu0 %v682
    %710 = vmatpush.bf16.msra.mxu0 %v681
    %711 = vmatpush.bf16.msra.mxu0 %v680
    %712 = vmatpush.bf16.msra.mxu0 %v679
    %713 = vmatpush.bf16.msra.mxu0 %v678
    %714 = vmatpush.bf16.msra.mxu0 %v677
    %715 = vmatpush.bf16.msra.mxu0 %v676
    %716 = vmatmul.bf16.gmra.mxu0 %v564
    %v717 = vpop.f32.mrf.mxu0
    %v718 = vadd.f32 %v610, %v717
    %v719 = vpop.f32.mrf.mxu0
    %720 = vdwg.mxu0
    %721 = vmatpush.bf16.msra.mxu0 %v691
    %722 = vmatpush.bf16.msra.mxu0 %v690
    %723 = vmatpush.bf16.msra.mxu0 %v689
    %724 = vmatpush.bf16.msra.mxu0 %v688
    %725 = vmatpush.bf16.msra.mxu0 %v687
    %726 = vmatpush.bf16.msra.mxu0 %v686
    %727 = vmatpush.bf16.msra.mxu0 %v685
    %728 = vmatpush.bf16.msra.mxu0 %v684
    %729 = vmatmul.bf16.gmra.mxu0 %v574
    %v730 = vpop.f32.mrf.mxu0
    %v731 = vadd.f32 %v718, %v730
    %v732 = vpop.f32.mrf.mxu0
    %733 = vdwg.mxu0
    %vm734 = vcmp.ge.f32.partialorder %v731, 0.0
    %v735 = vmul.f32 %v731, 0.01
    %v736 = vsel %vm734, %v731, %v735
    %v737 = vpack.c.bf16 %v736, %v736
    %v738 = vld [vmem:[%s11] sm:$0xff]
    %v739 = vld [vmem:[%s11 + $0x8] sm:$0xff]
    %v740 = vld [vmem:[%s11 + $0x10] sm:$0xff]
    %v741 = vld [vmem:[%s11 + $0x18] sm:$0xff]
    %v742 = vld [vmem:[%s11 + $0x20] sm:$0xff]
    %v743 = vld [vmem:[%s11 + $0x28] sm:$0xff]
    %v744 = vld [vmem:[%s11 + $0x30] sm:$0xff]
    %v745 = vld [vmem:[%s11 + $0x38] sm:$0xff]
    %v746 = vld [vmem:[%s11 + $0x40] sm:$0xff]
    %v747 = vld [vmem:[%s11 + $0x48] sm:$0xff]
    %v748 = vld [vmem:[%s11 + $0x50] sm:$0xff]
    %v749 = vld [vmem:[%s11 + $0x58] sm:$0xff]
    %v750 = vld [vmem:[%s11 + $0x60] sm:$0xff]
    %v751 = vld [vmem:[%s11 + $0x68] sm:$0xff]
    %v752 = vld [vmem:[%s11 + $0x70] sm:$0xff]
    %v753 = vld [vmem:[%s11 + $0x78] sm:$0xff]
    %v770 = vunpack.c.l.b16 %v738
    %v771 = vunpack.c.h.b16 %v738
    %v772 = vunpack.c.l.b16 %v739
    %v773 = vunpack.c.h.b16 %v739
    %v774 = vunpack.c.l.b16 %v740
    %v775 = vunpack.c.h.b16 %v740
    %v776 = vunpack.c.l.b16 %v741
    %v777 = vunpack.c.h.b16 %v741
    %v778 = vunpack.c.l.b16 %v742
    %v779 = vunpack.c.h.b16 %v742
    %v780 = vunpack.c.l.b16 %v743
    %v781 = vunpack.c.h.b16 %v743
    %v782 = vunpack.c.l.b16 %v744
    %v783 = vunpack.c.h.b16 %v744
    %v784 = vunpack.c.l.b16 %v745
    %v785 = vunpack.c.h.b16 %v745
    %v786 = vunpack.c.l.b16 %v746
    %v787 = vunpack.c.h.b16 %v746
    %v788 = vunpack.c.l.b16 %v747
    %v789 = vunpack.c.h.b16 %v747
    %v790 = vunpack.c.l.b16 %v748
    %v791 = vunpack.c.h.b16 %v748
    %v792 = vunpack.c.l.b16 %v749
    %v793 = vunpack.c.h.b16 %v749
    %v794 = vunpack.c.l.b16 %v750
    %v795 = vunpack.c.h.b16 %v750
    %v796 = vunpack.c.l.b16 %v751
    %v797 = vunpack.c.h.b16 %v751
    %v798 = vunpack.c.l.b16 %v752
    %v799 = vunpack.c.h.b16 %v752
    %v800 = vunpack.c.l.b16 %v753
    %v801 = vunpack.c.h.b16 %v753
    %v802 = vpack.c.b16 %v774, %v770
    %v803 = vpack.c.b16 %v775, %v771
    %v804 = vpack.c.b16 %v776, %v772
    %v805 = vpack.c.b16 %v777, %v773
    %v806 = vpack.c.b16 %v782, %v778
    %v807 = vpack.c.b16 %v783, %v779
    %v808 = vpack.c.b16 %v784, %v780
    %v809 = vpack.c.b16 %v785, %v781
    %v810 = vpack.c.b16 %v790, %v786
    %v811 = vpack.c.b16 %v791, %v787
    %v812 = vpack.c.b16 %v792, %v788
    %v813 = vpack.c.b16 %v793, %v789
    %v814 = vpack.c.b16 %v798, %v794
    %v815 = vpack.c.b16 %v799, %v795
    %v816 = vpack.c.b16 %v800, %v796
    %v817 = vpack.c.b16 %v801, %v797
    %vm834 = vcmask 523264
    %v836 = vsel %vm834, %v737, 0
    %838 = vmatpush.bf16.msra.mxu0 0
    %839 = vmatpush.bf16.msra.mxu0 0
    %840 = vmatpush.bf16.msra.mxu0 0
    %841 = vmatpush.bf16.msra.mxu0 0
    %842 = vmatpush.bf16.msra.mxu0 %v814
    %843 = vmatpush.bf16.msra.mxu0 %v810
    %844 = vmatpush.bf16.msra.mxu0 %v806
    %845 = vmatpush.bf16.msra.mxu0 %v802
    %846 = vmatmul.bf16.gmra.mxu0 %v836
    %v847 = vpop.f32.mrf.mxu0
    %v848 = vadd.f32 %v352, %v847
    %v849 = vpop.f32.mrf.mxu0
    %850 = vdwg.mxu0
    %851 = vmatpush.bf16.msra.mxu0 0
    %852 = vmatpush.bf16.msra.mxu0 0
    %853 = vmatpush.bf16.msra.mxu0 0
    %854 = vmatpush.bf16.msra.mxu0 0
    %855 = vmatpush.bf16.msra.mxu0 %v815
    %856 = vmatpush.bf16.msra.mxu0 %v811
    %857 = vmatpush.bf16.msra.mxu0 %v807
    %858 = vmatpush.bf16.msra.mxu0 %v803
    %859 = vmatmul.bf16.gmra.mxu0 %v836
    %v860 = vpop.f32.mrf.mxu0
    %v861 = vadd.f32 %v365, %v860
    %v862 = vpop.f32.mrf.mxu0
    %863 = vdwg.mxu0
    %864 = vmatpush.bf16.msra.mxu0 0
    %865 = vmatpush.bf16.msra.mxu0 0
    %866 = vmatpush.bf16.msra.mxu0 0
    %867 = vmatpush.bf16.msra.mxu0 0
    %868 = vmatpush.bf16.msra.mxu0 %v816
    %869 = vmatpush.bf16.msra.mxu0 %v812
    %870 = vmatpush.bf16.msra.mxu0 %v808
    %871 = vmatpush.bf16.msra.mxu0 %v804
    %872 = vmatmul.bf16.gmra.mxu0 %v836
    %v873 = vpop.f32.mrf.mxu0
    %v874 = vadd.f32 %v378, %v873
    %v875 = vpop.f32.mrf.mxu0
    %876 = vdwg.mxu0
    %877 = vmatpush.bf16.msra.mxu0 0
    %878 = vmatpush.bf16.msra.mxu0 0
    %879 = vmatpush.bf16.msra.mxu0 0
    %880 = vmatpush.bf16.msra.mxu0 0
    %881 = vmatpush.bf16.msra.mxu0 %v817
    %882 = vmatpush.bf16.msra.mxu0 %v813
    %883 = vmatpush.bf16.msra.mxu0 %v809
    %884 = vmatpush.bf16.msra.mxu0 %v805
    %885 = vmatmul.bf16.gmra.mxu0 %v836
    %v886 = vpop.f32.mrf.mxu0
    %v887 = vadd.f32 %v391, %v886
    %v888 = vpop.f32.mrf.mxu0
    %889 = vdwg.mxu0
    %v890 = vld [vmem:[%s12] sm:$0xf]
    %v892 = vperm.slane %v890, 0
    %v893 = vperm.slane %v890, 1
    %v894 = vperm.slane %v890, 2
    %v895 = vperm.slane %v890, 3
    %v900 = vadd.f32 %v848, %v892
    %v901 = vadd.f32 %v861, %v893
    %v902 = vadd.f32 %v874, %v894
    %v903 = vadd.f32 %v887, %v895
    %v904 = vmul.f32 %v900, 0.5
    %v905 = vtanh.pop %v904
    %v906 = vadd.f32 %v905, 1.0
    %v907 = vmul.f32 %v906, 0.5
    %v908 = vmul.f32 %v901, 0.5
    %v909 = vtanh.pop %v908
    %v910 = vadd.f32 %v909, 1.0
    %v911 = vmul.f32 %v910, 0.5
    %v912 = vtanh.pop %v902
    %v913 = vmul.f32 %v903, 0.5
    %v914 = vtanh.pop %v913
    %v915 = vadd.f32 %v914, 1.0
    %v916 = vmul.f32 %v915, 0.5
    %v917 = vmul.f32 %v911, %v71
    %v918 = vmul.f32 %v907, %v912
    %v919 = vadd.f32 %v917, %v918
    %v920 = vtanh.pop %v919
    %v921 = vmul.f32 %v916, %v920
    %922 = vst [vmem:[%s14] sm:$0x3] %v921
    %923 = vst [vmem:[%s15] sm:$0x3] %v919
    // Predicated region
    $region58: #{attention_decoder_forward.1} parent=1 // pred_check
      _
    $region59: #{attention_decoder_forward.1} parent=1 // pred_check_branch
      %925 = sbr.rel (0) target = $region61
    $region60: #{attention_decoder_forward.1} parent=1 // pred_region
      %927 = vsyncadd [#allocation5], 0
      %s929 = sshll.u32 [#allocation6], 4
      %s930 = int_to_ptr.vmem [resolvable:$true] %s929
      %s931 = sshll.u32 %s13, 4
      %s932 = int_to_ptr.hbm [resolvable:$true] %s931
      %934 = dma.vmem_to_hbm [thread:$0]  %s930, 32, %s932, [#allocation5]
    $region61: #{attention_decoder_forward.1} parent=1 // pred_fallthru
      _
    // Predicated region
    $region62: #{attention_decoder_forward.1} parent=1 // pred_check
      _
    $region63: #{attention_decoder_forward.1} parent=1 // pred_check_branch
      %936 = sbr.rel (0) target = $region65
    $region64: #{attention_decoder_forward.1} parent=1 // pred_region
      _
    $region65: #{attention_decoder_forward.1} parent=1 // pred_fallthru
      _
    // Predicated region
    $region66: #{attention_decoder_forward.1} parent=1 // pred_check
      _
    $region67: #{attention_decoder_forward.1} parent=1 // pred_check_branch
      %938 = sbr.rel (0) target = $region69
    $region68: #{attention_decoder_forward.1} parent=1 // pred_region
      _
    $region69: #{attention_decoder_forward.1} parent=1 // pred_fallthru
      _
    // Predicated region
    $region70: #{attention_decoder_forward.1} parent=1 // pred_check
      _
    $region71: #{attention_decoder_forward.1} parent=1 // pred_check_branch
      %940 = sbr.rel (0) target = $region73
    $region72: #{attention_decoder_forward.1} parent=1 // pred_region
      %942 = dma.done [#allocation5], 32
    $region73: #{attention_decoder_forward.1} parent=1 // pred_fallthru
      _
    // Predicated region
    $region74: #{attention_decoder_forward.1} parent=1 // pred_check
      _
    $region75: #{attention_decoder_forward.1} parent=1 // pred_check_branch
      %944 = sbr.rel (0) target = $region77
    $region76: #{attention_decoder_forward.1} parent=1 // pred_region
      _
    $region77: #{attention_decoder_forward.1} parent=1 // pred_fallthru
      _
    // Predicated region
    $region78: #{attention_decoder_forward.1} parent=1 // pred_check
      _
    $region79: #{attention_decoder_forward.1} parent=1 // pred_check_branch
      %946 = sbr.rel (0) target = $region81
    $region80: #{attention_decoder_forward.1} parent=1 // pred_region
      _
    $region81: #{attention_decoder_forward.1} parent=1 // pred_fallthru
      _
    %947 = vsyncpa [#allocation4], 1
    %948 = vsyncpa [#allocation5], 1

</llo_original>
